<compile_context>
chip_gen: v7x
topology: tpu7x:2x2x1
jax: 0.10.0
libtpu: 0.0.40
codegen_flags: <defaults>
</compile_context>

<pallas_src>
import jax
import jax.numpy as jnp
from jax.experimental import pallas as pl
from jax.experimental.pallas import tpu as pltpu


# ----------------------------- kernels ---------------------------------------
def _conv_im2col(x_f32, w_ref, K, P):
    """'same' conv1d (stride 1, zero pad P) as a single MXU matmul.

    x_f32 : (L, C) float32 activations (register value)
    w_ref : (K*C, Cout) ref with the folded conv weight (MXU dtype, e.g. bf16)
    returns (L, Cout) float32
    """
    L, C = x_f32.shape
    zp = jnp.zeros((P, C), jnp.float32)
    xp = jnp.concatenate([zp, x_f32, zp], axis=0)                         # (L+2P, C)
    cols = jnp.concatenate([xp[k:k + L, :] for k in range(K)], axis=1)    # (L, K*C)
    return jnp.dot(cols.astype(w_ref.dtype), w_ref[...],
                   preferred_element_type=jnp.float32)                    # (L, Cout)


def _resblock_body(x_ref, w1_ref, s1_ref, b1_ref, w2_ref, s2_ref, b2_ref,
                   out_ref, shortcut_f32):
    Cin = x_ref.shape[2]
    K = w1_ref.shape[0] // Cin
    P = (K - 1) // 2

    x = x_ref[0].astype(jnp.float32)                      # (L, Cin)

    # conv1 -> bn1 -> relu   (BN + conv bias folded into scale/shift)
    h1 = _conv_im2col(x, w1_ref, K, P)
    h1 = jnp.maximum(h1 * s1_ref[...] + b1_ref[...], 0.0)

    # conv2 -> bn2  (re-pad handled in registers, no scratch round-trip)
    h2 = _conv_im2col(h1, w2_ref, K, P)
    h2 = h2 * s2_ref[...] + b2_ref[...]

    out_ref[0] = jnp.maximum(h2 + shortcut_f32, 0.0).astype(out_ref.dtype)


def resblock_proj_kernel(x_ref, w1_ref, s1_ref, b1_ref, w2_ref, s2_ref, b2_ref,
                         wsc_ref, ssc_ref, bsc_ref, out_ref):
    """Projection shortcut: 1x1 conv -> BN (folded into scale/shift)."""
    sc = jnp.dot(x_ref[0], wsc_ref[...], preferred_element_type=jnp.float32)
    sc = sc * ssc_ref[...] + bsc_ref[...]
    _resblock_body(x_ref, w1_ref, s1_ref, b1_ref, w2_ref, s2_ref, b2_ref,
                   out_ref, sc)


def resblock_identity_kernel(x_ref, w1_ref, s1_ref, b1_ref, w2_ref, s2_ref,
                             b2_ref, out_ref):
    """Identity shortcut: no projection matmul at all."""
    sc = x_ref[0].astype(jnp.float32)
    _resblock_body(x_ref, w1_ref, s1_ref, b1_ref, w2_ref, s2_ref, b2_ref,
                   out_ref, sc)


# ----------------------------- wrapper ----------------------------------------
def fold_bn(gamma, beta, mean, var, conv_bias, eps=1e-5):
    """Fold eval-mode BatchNorm1d + preceding conv bias into scale/shift."""
    scale = gamma / jnp.sqrt(var + eps)
    shift = scale * (conv_bias - mean) + beta
    return scale.reshape(1, -1).astype(jnp.float32), \
        shift.reshape(1, -1).astype(jnp.float32)


def resblock_forward(x_ncl, params, kernel_size=9, padding=4,
                     compute_dtype=jnp.bfloat16):
    """x_ncl: (B, Cin, L) float32, PyTorch NCL. Returns (B, Cout, L) float32."""
    B, Cin, L = x_ncl.shape
    Cout = params["w1"].shape[0]
    K, P = kernel_size, padding
    assert P == (K - 1) // 2, "only 'same' padding (padding == (k-1)//2) supported"
    # TODO(synk): stride > 1 not implemented.

    # NCL -> NLC (channels on lanes); bf16 operands for the MXU.
    x_nlc = jnp.transpose(x_ncl, (0, 2, 1)).astype(compute_dtype)

    # PyTorch conv weight (Cout, Cin, K) -> im2col matrix (K*Cin, Cout),
    # k-major / c-minor, matching the in-kernel column layout.
    w1 = jnp.transpose(params["w1"], (2, 1, 0)).reshape(K * Cin, Cout)
    w2 = jnp.transpose(params["w2"], (2, 1, 0)).reshape(K * Cout, Cout)
    w1 = w1.astype(compute_dtype)
    w2 = w2.astype(compute_dtype)

    s1, b1 = fold_bn(params["bn1_g"], params["bn1_b"], params["bn1_m"],
                     params["bn1_v"], params["b1"])
    s2, b2 = fold_bn(params["bn2_g"], params["bn2_b"], params["bn2_m"],
                     params["bn2_v"], params["b2"])

    const = lambda b: (0, 0)
    vec_spec = pl.BlockSpec((1, Cout), const)

    in_specs = [
        pl.BlockSpec((1, L, Cin), lambda b: (b, 0, 0)),   # x: one batch row / step
        pl.BlockSpec((K * Cin, Cout), const),             # w1 (resident)
        vec_spec, vec_spec,                               # s1, b1
        pl.BlockSpec((K * Cout, Cout), const),            # w2 (resident)
        vec_spec, vec_spec,                               # s2, b2
    ]
    operands = [x_nlc, w1, s1, b1, w2, s2, b2]

    if params.get("wsc") is not None:
        wsc = jnp.transpose(params["wsc"][:, :, 0], (1, 0)).astype(compute_dtype)
        ssc, bsc = fold_bn(params["bnsc_g"], params["bnsc_b"], params["bnsc_m"],
                           params["bnsc_v"], params["bsc"])
        in_specs += [pl.BlockSpec((Cin, Cout), const), vec_spec, vec_spec]
        operands += [wsc, ssc, bsc]
        kernel = resblock_proj_kernel
    else:
        assert Cin == Cout, "identity shortcut requires in_channels == out_channels"
        kernel = resblock_identity_kernel

    out_nlc = pl.pallas_call(
        kernel,
        out_shape=jax.ShapeDtypeStruct((B, L, Cout), jnp.float32),
        grid=(B,),
        in_specs=in_specs,
        out_specs=pl.BlockSpec((1, L, Cout), lambda b: (b, 0, 0)),
        compiler_params=pltpu.CompilerParams(
            dimension_semantics=("parallel",),       # shard batch across TCs on v7x
            vmem_limit_bytes=64 * 1024 * 1024,       # fits v5e/v6e/v7x VMEM budgets
        ),
    )(*operands)

    return jnp.transpose(out_nlc, (0, 2, 1))  # back to NCL


# ------------------ pure-JAX reference (PyTorch semantics, eval BN) ------------
def _conv1d_ref(x_ncl, w_oik, bias, pad):
    y = jax.lax.conv_general_dilated(
        x_ncl, w_oik, window_strides=(1,), padding=[(pad, pad)],
        dimension_numbers=("NCH", "OIH", "NCH"))
    return y + bias[None, :, None]


def _bn_ref(y, g, b, m, v, eps=1e-5):
    return (y - m[None, :, None]) / jnp.sqrt(v[None, :, None] + eps) \
        * g[None, :, None] + b[None, :, None]


def resblock_ref(x_ncl, p, K=9, pad=4):
    if p.get("wsc") is not None:
        sc = _conv1d_ref(x_ncl, p["wsc"], p["bsc"], 0)
        sc = _bn_ref(sc, p["bnsc_g"], p["bnsc_b"], p["bnsc_m"], p["bnsc_v"])
    else:
        sc = x_ncl
    h = _conv1d_ref(x_ncl, p["w1"], p["b1"], pad)
    h = jnp.maximum(_bn_ref(h, p["bn1_g"], p["bn1_b"], p["bn1_m"], p["bn1_v"]), 0.0)
    h = _conv1d_ref(h, p["w2"], p["b2"], pad)
    h = _bn_ref(h, p["bn2_g"], p["bn2_b"], p["bn2_m"], p["bn2_v"])
    return jnp.maximum(h + sc, 0.0)


# ----------------------------------- test --------------------------------------
if __name__ == "__main__":
    K, PAD = 9, 4

    def rnd(k, shape, s=0.1):
        return s * jax.random.normal(k, shape, dtype=jnp.float32)

    def make_params(key, cin, cout, with_projection):
        ks = jax.random.split(key, 16)
        p = {
            "w1": rnd(ks[0], (cout, cin, K)),
            "b1": rnd(ks[1], (cout,)),
            "w2": rnd(ks[2], (cout, cout, K)),
            "b2": rnd(ks[3], (cout,)),
            "bn1_g": 1.0 + rnd(ks[6], (cout,)),
            "bn1_b": rnd(ks[7], (cout,)),
            "bn1_m": rnd(ks[8], (cout,)),
            "bn1_v": 1.0 + 0.1 * jnp.abs(jax.random.normal(ks[9], (cout,), jnp.float32)),
            "bn2_g": 1.0 + rnd(ks[10], (cout,)),
            "bn2_b": rnd(ks[11], (cout,)),
            "bn2_m": rnd(ks[12], (cout,)),
            "bn2_v": 1.0 + 0.1 * jnp.abs(jax.random.normal(ks[13], (cout,), jnp.float32)),
        }
        if with_projection:
            p.update({
                "wsc": rnd(ks[4], (cout, cin, 1)),
                "bsc": rnd(ks[5], (cout,)),
                "bnsc_g": 1.0 + rnd(ks[14], (cout,)),
                "bnsc_b": rnd(ks[15], (cout,)),
                "bnsc_m": jnp.zeros((cout,), jnp.float32),
                "bnsc_v": jnp.ones((cout,), jnp.float32),
            })
        else:
            p["wsc"] = None
        return p

    key = jax.random.PRNGKey(0)
    k_p1, k_p2, k_x1, k_x2 = jax.random.split(key, 4)

    # 1) projection-shortcut path (Cin != Cout)
    B, Cin, Cout, L = 2, 4, 8, 16
    params = make_params(k_p1, Cin, Cout, with_projection=True)
    x = jax.random.normal(k_x1, (B, Cin, L), dtype=jnp.float32)
    out = jax.block_until_ready(resblock_forward(x, params, K, PAD))
    ref = resblock_ref(x, params, K, PAD)
    assert out.shape == (B, Cout, L), out.shape
    err = jnp.max(jnp.abs(out - ref))
    assert jnp.allclose(out, ref, atol=3e-2, rtol=3e-2), \
        f"projection path max abs err {err}"

    # 2) identity-shortcut path (Cin == Cout) — skips the projection matmul
    Cid = 8
    params_id = make_params(k_p2, Cid, Cid, with_projection=False)
    x_id = jax.random.normal(k_x2, (B, Cid, L), dtype=jnp.float32)
    out_id = jax.block_until_ready(resblock_forward(x_id, params_id, K, PAD))
    ref_id = resblock_ref(x_id, params_id, K, PAD)
    assert out_id.shape == (B, Cid, L), out_id.shape
    err_id = jnp.max(jnp.abs(out_id - ref_id))
    assert jnp.allclose(out_id, ref_id, atol=3e-2, rtol=3e-2), \
        f"identity path max abs err {err_id}"

    print("KERNEL_OK")
</pallas_src>

<mosaic_0001>
module attributes {stable_mosaic.version = 11 : i64} {
  func.func @resblock_proj_kernel(%arg0: i32, %arg1: memref<1x16x4xbf16, #tpu.memory_space<vmem>>, %arg2: memref<36x8xbf16, #tpu.memory_space<vmem>>, %arg3: memref<1x8xf32, #tpu.memory_space<vmem>>, %arg4: memref<1x8xf32, #tpu.memory_space<vmem>>, %arg5: memref<72x8xbf16, #tpu.memory_space<vmem>>, %arg6: memref<1x8xf32, #tpu.memory_space<vmem>>, %arg7: memref<1x8xf32, #tpu.memory_space<vmem>>, %arg8: memref<4x8xbf16, #tpu.memory_space<vmem>>, %arg9: memref<1x8xf32, #tpu.memory_space<vmem>>, %arg10: memref<1x8xf32, #tpu.memory_space<vmem>>, %arg11: memref<1x16x8xf32, #tpu.memory_space<vmem>>) attributes {dimension_semantics = [#tpu.dimension_semantics<parallel>], iteration_bounds = array<i64: 2>, scalar_prefetch = 0 : i64, scratch_operands = 0 : i64, tpu.core_type = #tpu.core_type<tc>, window_params = [{transform_indices = @transform_0, window_bounds = array<i64: 1, 16, 4>}, {pipeline_mode = #tpu.pipeline_mode<synchronous>, transform_indices = @transform_1, window_bounds = array<i64: 36, 8>}, {pipeline_mode = #tpu.pipeline_mode<synchronous>, transform_indices = @transform_2, window_bounds = array<i64: 1, 8>}, {pipeline_mode = #tpu.pipeline_mode<synchronous>, transform_indices = @transform_3, window_bounds = array<i64: 1, 8>}, {pipeline_mode = #tpu.pipeline_mode<synchronous>, transform_indices = @transform_4, window_bounds = array<i64: 72, 8>}, {pipeline_mode = #tpu.pipeline_mode<synchronous>, transform_indices = @transform_5, window_bounds = array<i64: 1, 8>}, {pipeline_mode = #tpu.pipeline_mode<synchronous>, transform_indices = @transform_6, window_bounds = array<i64: 1, 8>}, {pipeline_mode = #tpu.pipeline_mode<synchronous>, transform_indices = @transform_7, window_bounds = array<i64: 4, 8>}, {pipeline_mode = #tpu.pipeline_mode<synchronous>, transform_indices = @transform_8, window_bounds = array<i64: 1, 8>}, {pipeline_mode = #tpu.pipeline_mode<synchronous>, transform_indices = @transform_9, window_bounds = array<i64: 1, 8>}, {transform_indices = @transform_10, window_bounds = array<i64: 1, 16, 8>}]} {
    %c0 = arith.constant 0 : index
    %c0_0 = arith.constant 0 : index
    %c0_1 = arith.constant 0 : index
    %0 = vector.load %arg1[%c0, %c0_0, %c0_1] : memref<1x16x4xbf16, #tpu.memory_space<vmem>>, vector<1x16x4xbf16>
    %1 = vector.shape_cast %0 : vector<1x16x4xbf16> to vector<16x4xbf16>
    %c0_2 = arith.constant 0 : index
    %c0_3 = arith.constant 0 : index
    %2 = vector.load %arg8[%c0_2, %c0_3] : memref<4x8xbf16, #tpu.memory_space<vmem>>, vector<4x8xbf16>
    %cst = arith.constant dense<0.000000e+00> : vector<16x8xf32>
    %3 = tpu.matmul %1, %2, %cst {dimension_numbers = #tpu.dot_dimension_numbers<[1], [0], [0], [1], [0, 0, 1, 1], [], []>} : vector<16x4xbf16>, vector<4x8xbf16>, vector<16x8xf32> -> vector<16x8xf32>
    %c0_4 = arith.constant 0 : index
    %c0_5 = arith.constant 0 : index
    %4 = vector.load %arg9[%c0_4, %c0_5] : memref<1x8xf32, #tpu.memory_space<vmem>>, vector<1x8xf32>
    %5 = vector.broadcast %4 : vector<1x8xf32> to vector<16x8xf32>
    %6 = arith.mulf %3, %5 : vector<16x8xf32>
    %c0_6 = arith.constant 0 : index
    %c0_7 = arith.constant 0 : index
    %7 = vector.load %arg10[%c0_6, %c0_7] : memref<1x8xf32, #tpu.memory_space<vmem>>, vector<1x8xf32>
    %8 = vector.broadcast %7 : vector<1x8xf32> to vector<16x8xf32>
    %9 = arith.addf %6, %8 : vector<16x8xf32>
    %c0_8 = arith.constant 0 : index
    %c0_9 = arith.constant 0 : index
    %c0_10 = arith.constant 0 : index
    %10 = vector.load %arg1[%c0_8, %c0_9, %c0_10] : memref<1x16x4xbf16, #tpu.memory_space<vmem>>, vector<1x16x4xbf16>
    %11 = vector.shape_cast %10 : vector<1x16x4xbf16> to vector<16x4xbf16>
    %12 = arith.extf %11 : vector<16x4xbf16> to vector<16x4xf32>
    %cst_11 = arith.constant 0.000000e+00 : f32
    %13 = vector.broadcast %cst_11 : f32 to vector<4x4xf32>
    %14 = tpu.concatenate %13, %12, %13 in 0 : vector<4x4xf32>, vector<16x4xf32>, vector<4x4xf32> -> vector<24x4xf32>
    %15 = vector.extract_strided_slice %14 {offsets = [0, 0], sizes = [16, 4], strides = [1, 1]} : vector<24x4xf32> to vector<16x4xf32>
    %16 = vector.extract_strided_slice %14 {offsets = [1, 0], sizes = [16, 4], strides = [1, 1]} : vector<24x4xf32> to vector<16x4xf32>
    %17 = vector.extract_strided_slice %14 {offsets = [2, 0], sizes = [16, 4], strides = [1, 1]} : vector<24x4xf32> to vector<16x4xf32>
    %18 = vector.extract_strided_slice %14 {offsets = [3, 0], sizes = [16, 4], strides = [1, 1]} : vector<24x4xf32> to vector<16x4xf32>
    %19 = vector.extract_strided_slice %14 {offsets = [4, 0], sizes = [16, 4], strides = [1, 1]} : vector<24x4xf32> to vector<16x4xf32>
    %20 = vector.extract_strided_slice %14 {offsets = [5, 0], sizes = [16, 4], strides = [1, 1]} : vector<24x4xf32> to vector<16x4xf32>
    %21 = vector.extract_strided_slice %14 {offsets = [6, 0], sizes = [16, 4], strides = [1, 1]} : vector<24x4xf32> to vector<16x4xf32>
    %22 = vector.extract_strided_slice %14 {offsets = [7, 0], sizes = [16, 4], strides = [1, 1]} : vector<24x4xf32> to vector<16x4xf32>
    %23 = vector.extract_strided_slice %14 {offsets = [8, 0], sizes = [16, 4], strides = [1, 1]} : vector<24x4xf32> to vector<16x4xf32>
    %24 = tpu.concatenate %15, %16, %17, %18, %19, %20, %21, %22, %23 in 1 : vector<16x4xf32>, vector<16x4xf32>, vector<16x4xf32>, vector<16x4xf32>, vector<16x4xf32>, vector<16x4xf32>, vector<16x4xf32>, vector<16x4xf32>, vector<16x4xf32> -> vector<16x36xf32>
    %25 = arith.truncf %24 : vector<16x36xf32> to vector<16x36xbf16>
    %c0_12 = arith.constant 0 : index
    %c0_13 = arith.constant 0 : index
    %26 = vector.load %arg2[%c0_12, %c0_13] : memref<36x8xbf16, #tpu.memory_space<vmem>>, vector<36x8xbf16>
    %cst_14 = arith.constant dense<0.000000e+00> : vector<16x8xf32>
    %27 = tpu.matmul %25, %26, %cst_14 {dimension_numbers = #tpu.dot_dimension_numbers<[1], [0], [0], [1], [0, 0, 1, 1], [], []>} : vector<16x36xbf16>, vector<36x8xbf16>, vector<16x8xf32> -> vector<16x8xf32>
    %c0_15 = arith.constant 0 : index
    %c0_16 = arith.constant 0 : index
    %28 = vector.load %arg3[%c0_15, %c0_16] : memref<1x8xf32, #tpu.memory_space<vmem>>, vector<1x8xf32>
    %29 = vector.broadcast %28 : vector<1x8xf32> to vector<16x8xf32>
    %30 = arith.mulf %27, %29 : vector<16x8xf32>
    %c0_17 = arith.constant 0 : index
    %c0_18 = arith.constant 0 : index
    %31 = vector.load %arg4[%c0_17, %c0_18] : memref<1x8xf32, #tpu.memory_space<vmem>>, vector<1x8xf32>
    %32 = vector.broadcast %31 : vector<1x8xf32> to vector<16x8xf32>
    %33 = arith.addf %30, %32 : vector<16x8xf32>
    %cst_19 = arith.constant 0.000000e+00 : f32
    %34 = vector.broadcast %cst_19 : f32 to vector<16x8xf32>
    %35 = arith.maximumf %33, %34 : vector<16x8xf32>
    %cst_20 = arith.constant 0.000000e+00 : f32
    %36 = vector.broadcast %cst_20 : f32 to vector<4x8xf32>
    %37 = tpu.concatenate %36, %35, %36 in 0 : vector<4x8xf32>, vector<16x8xf32>, vector<4x8xf32> -> vector<24x8xf32>
    %38 = vector.extract_strided_slice %37 {offsets = [0, 0], sizes = [16, 8], strides = [1, 1]} : vector<24x8xf32> to vector<16x8xf32>
    %39 = vector.extract_strided_slice %37 {offsets = [1, 0], sizes = [16, 8], strides = [1, 1]} : vector<24x8xf32> to vector<16x8xf32>
    %40 = vector.extract_strided_slice %37 {offsets = [2, 0], sizes = [16, 8], strides = [1, 1]} : vector<24x8xf32> to vector<16x8xf32>
    %41 = vector.extract_strided_slice %37 {offsets = [3, 0], sizes = [16, 8], strides = [1, 1]} : vector<24x8xf32> to vector<16x8xf32>
    %42 = vector.extract_strided_slice %37 {offsets = [4, 0], sizes = [16, 8], strides = [1, 1]} : vector<24x8xf32> to vector<16x8xf32>
    %43 = vector.extract_strided_slice %37 {offsets = [5, 0], sizes = [16, 8], strides = [1, 1]} : vector<24x8xf32> to vector<16x8xf32>
    %44 = vector.extract_strided_slice %37 {offsets = [6, 0], sizes = [16, 8], strides = [1, 1]} : vector<24x8xf32> to vector<16x8xf32>
    %45 = vector.extract_strided_slice %37 {offsets = [7, 0], sizes = [16, 8], strides = [1, 1]} : vector<24x8xf32> to vector<16x8xf32>
    %46 = vector.extract_strided_slice %37 {offsets = [8, 0], sizes = [16, 8], strides = [1, 1]} : vector<24x8xf32> to vector<16x8xf32>
    %47 = tpu.concatenate %38, %39, %40, %41, %42, %43, %44, %45, %46 in 1 : vector<16x8xf32>, vector<16x8xf32>, vector<16x8xf32>, vector<16x8xf32>, vector<16x8xf32>, vector<16x8xf32>, vector<16x8xf32>, vector<16x8xf32>, vector<16x8xf32> -> vector<16x72xf32>
    %48 = arith.truncf %47 : vector<16x72xf32> to vector<16x72xbf16>
    %c0_21 = arith.constant 0 : index
    %c0_22 = arith.constant 0 : index
    %49 = vector.load %arg5[%c0_21, %c0_22] : memref<72x8xbf16, #tpu.memory_space<vmem>>, vector<72x8xbf16>
    %cst_23 = arith.constant dense<0.000000e+00> : vector<16x8xf32>
    %50 = tpu.matmul %48, %49, %cst_23 {dimension_numbers = #tpu.dot_dimension_numbers<[1], [0], [0], [1], [0, 0, 1, 1], [], []>} : vector<16x72xbf16>, vector<72x8xbf16>, vector<16x8xf32> -> vector<16x8xf32>
    %c0_24 = arith.constant 0 : index
    %c0_25 = arith.constant 0 : index
    %51 = vector.load %arg6[%c0_24, %c0_25] : memref<1x8xf32, #tpu.memory_space<vmem>>, vector<1x8xf32>
    %52 = vector.broadcast %51 : vector<1x8xf32> to vector<16x8xf32>
    %53 = arith.mulf %50, %52 : vector<16x8xf32>
    %c0_26 = arith.constant 0 : index
    %c0_27 = arith.constant 0 : index
    %54 = vector.load %arg7[%c0_26, %c0_27] : memref<1x8xf32, #tpu.memory_space<vmem>>, vector<1x8xf32>
    %55 = vector.broadcast %54 : vector<1x8xf32> to vector<16x8xf32>
    %56 = arith.addf %53, %55 : vector<16x8xf32>
    %57 = arith.addf %56, %9 : vector<16x8xf32>
    %cst_28 = arith.constant 0.000000e+00 : f32
    %58 = vector.broadcast %cst_28 : f32 to vector<16x8xf32>
    %59 = arith.maximumf %57, %58 : vector<16x8xf32>
    %c0_29 = arith.constant 0 : index
    %c0_30 = arith.constant 0 : index
    %c0_31 = arith.constant 0 : index
    %60 = vector.load %arg11[%c0_29, %c0_30, %c0_31] : memref<1x16x8xf32, #tpu.memory_space<vmem>>, vector<1x16x8xf32>
    %61 = vector.shape_cast %60 : vector<1x16x8xf32> to vector<16x8xf32>
    %62 = vector.shape_cast %59 : vector<16x8xf32> to vector<1x16x8xf32>
    tpu.vector_store %arg11[%c0_29, %c0_30, %c0_31], %62 {strides = array<i32>} : memref<1x16x8xf32, #tpu.memory_space<vmem>>, vector<1x16x8xf32>,
    return
  }
  func.func @transform_0(%arg0: i32) -> (i32, i32, i32) {
    %c0_i32 = arith.constant 0 : i32
    %c0_i32_0 = arith.constant 0 : i32
    %c0_i32_1 = arith.constant 0 : i32
    return %arg0, %c0_i32, %c0_i32_0 : i32, i32, i32
  }
  func.func @transform_1(%arg0: i32) -> (i32, i32) {
    %c0_i32 = arith.constant 0 : i32
    %c0_i32_0 = arith.constant 0 : i32
    %c0_i32_1 = arith.constant 0 : i32
    return %c0_i32, %c0_i32_0 : i32, i32
  }
  func.func @transform_2(%arg0: i32) -> (i32, i32) {
    %c0_i32 = arith.constant 0 : i32
    %c0_i32_0 = arith.constant 0 : i32
    %c0_i32_1 = arith.constant 0 : i32
    return %c0_i32, %c0_i32_0 : i32, i32
  }
  func.func @transform_3(%arg0: i32) -> (i32, i32) {
    %c0_i32 = arith.constant 0 : i32
    %c0_i32_0 = arith.constant 0 : i32
    %c0_i32_1 = arith.constant 0 : i32
    return %c0_i32, %c0_i32_0 : i32, i32
  }
  func.func @transform_4(%arg0: i32) -> (i32, i32) {
    %c0_i32 = arith.constant 0 : i32
    %c0_i32_0 = arith.constant 0 : i32
    %c0_i32_1 = arith.constant 0 : i32
    return %c0_i32, %c0_i32_0 : i32, i32
  }
  func.func @transform_5(%arg0: i32) -> (i32, i32) {
    %c0_i32 = arith.constant 0 : i32
    %c0_i32_0 = arith.constant 0 : i32
    %c0_i32_1 = arith.constant 0 : i32
    return %c0_i32, %c0_i32_0 : i32, i32
  }
  func.func @transform_6(%arg0: i32) -> (i32, i32) {
    %c0_i32 = arith.constant 0 : i32
    %c0_i32_0 = arith.constant 0 : i32
    %c0_i32_1 = arith.constant 0 : i32
    return %c0_i32, %c0_i32_0 : i32, i32
  }
  func.func @transform_7(%arg0: i32) -> (i32, i32) {
    %c0_i32 = arith.constant 0 : i32
    %c0_i32_0 = arith.constant 0 : i32
    %c0_i32_1 = arith.constant 0 : i32
    return %c0_i32, %c0_i32_0 : i32, i32
  }
  func.func @transform_8(%arg0: i32) -> (i32, i32) {
    %c0_i32 = arith.constant 0 : i32
    %c0_i32_0 = arith.constant 0 : i32
    %c0_i32_1 = arith.constant 0 : i32
    return %c0_i32, %c0_i32_0 : i32, i32
  }
  func.func @transform_9(%arg0: i32) -> (i32, i32) {
    %c0_i32 = arith.constant 0 : i32
    %c0_i32_0 = arith.constant 0 : i32
    %c0_i32_1 = arith.constant 0 : i32
    return %c0_i32, %c0_i32_0 : i32, i32
  }
  func.func @transform_10(%arg0: i32) -> (i32, i32, i32) {
    %c0_i32 = arith.constant 0 : i32
    %c0_i32_0 = arith.constant 0 : i32
    %c0_i32_1 = arith.constant 0 : i32
    return %arg0, %c0_i32, %c0_i32_0 : i32, i32, i32
  }
}

</mosaic_0001>

<llo_original>
// kernel: tpu_custom_call.1
$region0: #{tpu_custom_call.1}
  #allocation0 [shape = 'u32[]', space=smem, size = 0x4, offset = 0x4, fixed_abs, tag = 'smem constant byte address 0x4 - core index']
  #allocation1 [shape = 'u32[144,128]{1,0:T(1,128)}', space=vmem, size = 0x12000, scoped, tag = 'internal scratch']
  %s0 = inlined_call_operand.hbm [shape: bf16[2,16,4], index: 0, kind: input, shape index: {}]
  %s1 = inlined_call_operand.hbm [shape: bf16[36,8], index: 1, kind: input, shape index: {}]
  %s2 = inlined_call_operand.hbm [shape: f32[1,8], index: 2, kind: input, shape index: {}]
  %s3 = inlined_call_operand.hbm [shape: f32[1,8], index: 3, kind: input, shape index: {}]
  %s4 = inlined_call_operand.hbm [shape: bf16[72,8], index: 4, kind: input, shape index: {}]
  %s5 = inlined_call_operand.hbm [shape: f32[1,8], index: 5, kind: input, shape index: {}]
  %s6 = inlined_call_operand.hbm [shape: f32[1,8], index: 6, kind: input, shape index: {}]
  %s7 = inlined_call_operand.hbm [shape: bf16[4,8], index: 7, kind: input, shape index: {}]
  %s8 = inlined_call_operand.hbm [shape: f32[1,8], index: 8, kind: input, shape index: {}]
  %s9 = inlined_call_operand.hbm [shape: f32[1,8], index: 9, kind: input, shape index: {}]
  %s10 = inlined_call_operand.hbm [shape: f32[2,16,8], index: 10, kind: output, shape index: {}]
  %s11 = sld [smem:[#allocation0]]
  $region113: #{tpu_custom_call.1} parent=0
    _
  %s13 = ssub.s32 1, %s11
  %s14 = scalar_select 0, %s13, %s11
  $region1: #{tpu_custom_call.1} parent=0
    #allocation2 [shape = 'u8[8192]{0}', space=vmem, size = 0x2000, scoped, tag = 'input window, operand 0']
    #allocation3 [shape = 's32[2]{0}', space=sflag, size = 0x8, scoped, tag = 'scoped memory for tpu_custom_call.1']
    #allocation4 [shape = 's32[2]{0}', space=sflag, size = 0x8, scoped, tag = 'scoped memory for tpu_custom_call.1']
    #allocation5 [shape = 'u8[10240]{0}', space=vmem, size = 0x2800, scoped, tag = 'input window, operand 1, single buffered']
    #allocation6 [shape = 's32[1]{0}', space=sflag, size = 0x4, scoped, tag = 'scoped memory for tpu_custom_call.1']
    #allocation7 [shape = 'u8[512]{0}', space=vmem, size = 0x400, scoped, tag = 'input window, operand 2, single buffered']
    #allocation8 [shape = 'u8[512]{0}', space=vmem, size = 0x400, scoped, tag = 'input window, operand 3, single buffered']
    #allocation9 [shape = 's32[1]{0}', space=sflag, size = 0x4, scoped, tag = 'scoped memory for tpu_custom_call.1']
    #allocation10 [shape = 'u8[18432]{0}', space=vmem, size = 0x4800, scoped, tag = 'input window, operand 4, single buffered']
    #allocation11 [shape = 'u8[512]{0}', space=vmem, size = 0x400, scoped, tag = 'input window, operand 5, single buffered']
    #allocation12 [shape = 's32[1]{0}', space=sflag, size = 0x4, scoped, tag = 'scoped memory for tpu_custom_call.1']
    #allocation13 [shape = 'u8[512]{0}', space=vmem, size = 0x400, scoped, tag = 'input window, operand 6, single buffered']
    #allocation14 [shape = 'u8[1024]{0}', space=vmem, size = 0x400, scoped, tag = 'input window, operand 7, single buffered']
    #allocation15 [shape = 's32[1]{0}', space=sflag, size = 0x4, scoped, tag = 'scoped memory for tpu_custom_call.1']
    #allocation16 [shape = 'u8[512]{0}', space=vmem, size = 0x400, scoped, tag = 'input window, operand 8, single buffered']
    #allocation17 [shape = 'u8[512]{0}', space=vmem, size = 0x400, scoped, tag = 'input window, operand 9, single buffered']
    #allocation18 [shape = 's32[1]{0}', space=sflag, size = 0x4, scoped, tag = 'scoped memory for tpu_custom_call.1']
    #allocation19 [shape = 'u8[16384]{0}', space=vmem, size = 0x4000, scoped, tag = 'output window, operand 0']
    %15 = vsyncpa [#allocation3], 0
    %s16 = scalar_lea.sflag [#allocation3], 1
    %17 = vsyncpa %s16, 0
    %18 = vsyncpa [#allocation6], 0
    %19 = vsyncpa [#allocation9], 0
    %20 = vsyncpa [#allocation12], 0
    %21 = vsyncpa [#allocation15], 0
    %22 = vsyncpa [#allocation18], 0
    %23 = vsyncpa [#allocation4], 0
    %s24 = scalar_lea.sflag [#allocation4], 1
    %25 = vsyncpa %s24, 0
    loop: start=0, step=1, limit=4
    $region2: #{tpu_custom_call.1} parent=1 // loop_pre_header
      _
    $region3: #{tpu_custom_call.1} parent=1 // loop_header
      %s27 = sphi 0, %s31
      %p28 = scmp.ge.s32.totalorder %s27, 4
      %s37 = sphi 0, %s39
      %s40 = sphi 0, %s37
      %s41 = sphi 0, %s40
      %s57 = sphi 0, %s41
      %s61 = sphi 0, %s61
      %s63 = sphi 0, %s61
      %s64 = sphi 0, %s63
      %s78 = sphi 0, %s64
      %s82 = sphi 0, %s82
      %s84 = sphi 0, %s82
      %s85 = sphi 0, %s84
      %s99 = sphi 0, %s85
      %s103 = sphi 0, %s103
      %s105 = sphi 0, %s103
      %s106 = sphi 0, %s105
      %s120 = sphi 0, %s106
      %s124 = sphi 0, %s124
      %s126 = sphi 0, %s124
      %s127 = sphi 0, %s126
      %s141 = sphi 0, %s127
      %s145 = sphi 0, %s145
      %s147 = sphi 0, %s145
      %s148 = sphi 0, %s147
      %s162 = sphi 0, %s148
      %s166 = sphi 0, %s166
      %s168 = sphi 0, %s166
      %s169 = sphi 0, %s168
      %s183 = sphi 0, %s169
      %s187 = sphi 0, %s187
      %s189 = sphi 0, %s187
      %s190 = sphi 0, %s189
      %s204 = sphi 0, %s190
      %s208 = sphi 0, %s208
      %s210 = sphi 0, %s208
      %s211 = sphi 0, %s210
      %s225 = sphi 0, %s211
      %s229 = sphi 0, %s229
      %s231 = sphi 0, %s229
      %s232 = sphi 0, %s231
      %s246 = sphi 0, %s232
      %s252 = sphi 0, %s254
      %s255 = sphi 0, %s252
      %s256 = sphi 0, %s255
      %s272 = sphi 0, %s256
    $region4: #{tpu_custom_call.1} parent=1 // loop_header_branch
      %30 = sbr.rel (%p28) target = $region8
    $region5: #{tpu_custom_call.1} parent=1 // loop_body
      %s32 = ssub.s32 %s27, 1
      %s33 = ssub.s32 %s27, 2
      %s34 = sadd.s32 %s27, 1
      %s35 = ssub.s32 %s27, %s34
      %p36 = scmp.eq.s32.totalorder %s35, 0
      %s38 = sadd.s32 %s37, 1
      %s39 = scalar_select %p36, %s37, %s38
      %p42 = pneg %p36
      %p43 = scmp.eq.s32.totalorder %s27, 1
      %p44 = por %p42, %p43
      %p45 = scmp.ne.s32.totalorder %s37, %s40
      %p46 = scmp.eq.s32.totalorder %s27, 0
      %p47 = por %p45, %p46
      %p48 = scmp.ne.s32.totalorder %s37, %s40
      %p49 = scmp.eq.s32.totalorder %s32, 1
      %p50 = por %p48, %p49
      %p51 = scmp.ne.s32.totalorder %s40, %s41
      %p52 = scmp.eq.s32.totalorder %s32, 0
      %p53 = por %p51, %p52
      %p54 = scmp.ne.s32.totalorder %s40, %s41
      %p55 = scmp.eq.s32.totalorder %s33, 1
      %p56 = por %p54, %p55
      %p58 = scmp.ne.s32.totalorder %s41, %s57
      %p59 = scmp.eq.s32.totalorder %s33, 0
      %p60 = por %p58, %p59
      %s62 = sadd.s32 %s61, 1
      %p65 = scmp.eq.s32.totalorder %s27, 1
      %p66 = scmp.ne.s32.totalorder %s61, %s63
      %p67 = scmp.eq.s32.totalorder %s27, 0
      %p68 = por %p66, %p67
      %p69 = scmp.ne.s32.totalorder %s61, %s63
      %p70 = scmp.eq.s32.totalorder %s32, 1
      %p71 = por %p69, %p70
      %p72 = scmp.ne.s32.totalorder %s63, %s64
      %p73 = scmp.eq.s32.totalorder %s32, 0
      %p74 = por %p72, %p73
      %p75 = scmp.ne.s32.totalorder %s63, %s64
      %p76 = scmp.eq.s32.totalorder %s33, 1
      %p77 = por %p75, %p76
      %p79 = scmp.ne.s32.totalorder %s64, %s78
      %p80 = scmp.eq.s32.totalorder %s33, 0
      %p81 = por %p79, %p80
      %s83 = sadd.s32 %s82, 1
      %p86 = scmp.eq.s32.totalorder %s27, 1
      %p87 = scmp.ne.s32.totalorder %s82, %s84
      %p88 = scmp.eq.s32.totalorder %s27, 0
      %p89 = por %p87, %p88
      %p90 = scmp.ne.s32.totalorder %s82, %s84
      %p91 = scmp.eq.s32.totalorder %s32, 1
      %p92 = por %p90, %p91
      %p93 = scmp.ne.s32.totalorder %s84, %s85
      %p94 = scmp.eq.s32.totalorder %s32, 0
      %p95 = por %p93, %p94
      %p96 = scmp.ne.s32.totalorder %s84, %s85
      %p97 = scmp.eq.s32.totalorder %s33, 1
      %p98 = por %p96, %p97
      %p100 = scmp.ne.s32.totalorder %s85, %s99
      %p101 = scmp.eq.s32.totalorder %s33, 0
      %p102 = por %p100, %p101
      %s104 = sadd.s32 %s103, 1
      %p107 = scmp.eq.s32.totalorder %s27, 1
      %p108 = scmp.ne.s32.totalorder %s103, %s105
      %p109 = scmp.eq.s32.totalorder %s27, 0
      %p110 = por %p108, %p109
      %p111 = scmp.ne.s32.totalorder %s103, %s105
      %p112 = scmp.eq.s32.totalorder %s32, 1
      %p113 = por %p111, %p112
      %p114 = scmp.ne.s32.totalorder %s105, %s106
      %p115 = scmp.eq.s32.totalorder %s32, 0
      %p116 = por %p114, %p115
      %p117 = scmp.ne.s32.totalorder %s105, %s106
      %p118 = scmp.eq.s32.totalorder %s33, 1
      %p119 = por %p117, %p118
      %p121 = scmp.ne.s32.totalorder %s106, %s120
      %p122 = scmp.eq.s32.totalorder %s33, 0
      %p123 = por %p121, %p122
      %s125 = sadd.s32 %s124, 1
      %p128 = scmp.eq.s32.totalorder %s27, 1
      %p129 = scmp.ne.s32.totalorder %s124, %s126
      %p130 = scmp.eq.s32.totalorder %s27, 0
      %p131 = por %p129, %p130
      %p132 = scmp.ne.s32.totalorder %s124, %s126
      %p133 = scmp.eq.s32.totalorder %s32, 1
      %p134 = por %p132, %p133
      %p135 = scmp.ne.s32.totalorder %s126, %s127
      %p136 = scmp.eq.s32.totalorder %s32, 0
      %p137 = por %p135, %p136
      %p138 = scmp.ne.s32.totalorder %s126, %s127
      %p139 = scmp.eq.s32.totalorder %s33, 1
      %p140 = por %p138, %p139
      %p142 = scmp.ne.s32.totalorder %s127, %s141
      %p143 = scmp.eq.s32.totalorder %s33, 0
      %p144 = por %p142, %p143
      %s146 = sadd.s32 %s145, 1
      %p149 = scmp.eq.s32.totalorder %s27, 1
      %p150 = scmp.ne.s32.totalorder %s145, %s147
      %p151 = scmp.eq.s32.totalorder %s27, 0
      %p152 = por %p150, %p151
      %p153 = scmp.ne.s32.totalorder %s145, %s147
      %p154 = scmp.eq.s32.totalorder %s32, 1
      %p155 = por %p153, %p154
      %p156 = scmp.ne.s32.totalorder %s147, %s148
      %p157 = scmp.eq.s32.totalorder %s32, 0
      %p158 = por %p156, %p157
      %p159 = scmp.ne.s32.totalorder %s147, %s148
      %p160 = scmp.eq.s32.totalorder %s33, 1
      %p161 = por %p159, %p160
      %p163 = scmp.ne.s32.totalorder %s148, %s162
      %p164 = scmp.eq.s32.totalorder %s33, 0
      %p165 = por %p163, %p164
      %s167 = sadd.s32 %s166, 1
      %p170 = scmp.eq.s32.totalorder %s27, 1
      %p171 = scmp.ne.s32.totalorder %s166, %s168
      %p172 = scmp.eq.s32.totalorder %s27, 0
      %p173 = por %p171, %p172
      %p174 = scmp.ne.s32.totalorder %s166, %s168
      %p175 = scmp.eq.s32.totalorder %s32, 1
      %p176 = por %p174, %p175
      %p177 = scmp.ne.s32.totalorder %s168, %s169
      %p178 = scmp.eq.s32.totalorder %s32, 0
      %p179 = por %p177, %p178
      %p180 = scmp.ne.s32.totalorder %s168, %s169
      %p181 = scmp.eq.s32.totalorder %s33, 1
      %p182 = por %p180, %p181
      %p184 = scmp.ne.s32.totalorder %s169, %s183
      %p185 = scmp.eq.s32.totalorder %s33, 0
      %p186 = por %p184, %p185
      %s188 = sadd.s32 %s187, 1
      %p191 = scmp.eq.s32.totalorder %s27, 1
      %p192 = scmp.ne.s32.totalorder %s187, %s189
      %p193 = scmp.eq.s32.totalorder %s27, 0
      %p194 = por %p192, %p193
      %p195 = scmp.ne.s32.totalorder %s187, %s189
      %p196 = scmp.eq.s32.totalorder %s32, 1
      %p197 = por %p195, %p196
      %p198 = scmp.ne.s32.totalorder %s189, %s190
      %p199 = scmp.eq.s32.totalorder %s32, 0
      %p200 = por %p198, %p199
      %p201 = scmp.ne.s32.totalorder %s189, %s190
      %p202 = scmp.eq.s32.totalorder %s33, 1
      %p203 = por %p201, %p202
      %p205 = scmp.ne.s32.totalorder %s190, %s204
      %p206 = scmp.eq.s32.totalorder %s33, 0
      %p207 = por %p205, %p206
      %s209 = sadd.s32 %s208, 1
      %p212 = scmp.eq.s32.totalorder %s27, 1
      %p213 = scmp.ne.s32.totalorder %s208, %s210
      %p214 = scmp.eq.s32.totalorder %s27, 0
      %p215 = por %p213, %p214
      %p216 = scmp.ne.s32.totalorder %s208, %s210
      %p217 = scmp.eq.s32.totalorder %s32, 1
      %p218 = por %p216, %p217
      %p219 = scmp.ne.s32.totalorder %s210, %s211
      %p220 = scmp.eq.s32.totalorder %s32, 0
      %p221 = por %p219, %p220
      %p222 = scmp.ne.s32.totalorder %s210, %s211
      %p223 = scmp.eq.s32.totalorder %s33, 1
      %p224 = por %p222, %p223
      %p226 = scmp.ne.s32.totalorder %s211, %s225
      %p227 = scmp.eq.s32.totalorder %s33, 0
      %p228 = por %p226, %p227
      %s230 = sadd.s32 %s229, 1
      %p233 = scmp.eq.s32.totalorder %s27, 1
      %p234 = scmp.ne.s32.totalorder %s229, %s231
      %p235 = scmp.eq.s32.totalorder %s27, 0
      %p236 = por %p234, %p235
      %p237 = scmp.ne.s32.totalorder %s229, %s231
      %p238 = scmp.eq.s32.totalorder %s32, 1
      %p239 = por %p237, %p238
      %p240 = scmp.ne.s32.totalorder %s231, %s232
      %p241 = scmp.eq.s32.totalorder %s32, 0
      %p242 = por %p240, %p241
      %p243 = scmp.ne.s32.totalorder %s231, %s232
      %p244 = scmp.eq.s32.totalorder %s33, 1
      %p245 = por %p243, %p244
      %p247 = scmp.ne.s32.totalorder %s232, %s246
      %p248 = scmp.eq.s32.totalorder %s33, 0
      %p249 = por %p247, %p248
      %s250 = ssub.s32 %s27, %s34
      %p251 = scmp.eq.s32.totalorder %s250, 0
      %s253 = sadd.s32 %s252, 1
      %s254 = scalar_select %p251, %s252, %s253
      %p257 = pneg %p251
      %p258 = scmp.eq.s32.totalorder %s27, 1
      %p259 = por %p257, %p258
      %p260 = scmp.ne.s32.totalorder %s252, %s255
      %p261 = scmp.eq.s32.totalorder %s27, 0
      %p262 = por %p260, %p261
      %p263 = scmp.ne.s32.totalorder %s252, %s255
      %p264 = scmp.eq.s32.totalorder %s32, 1
      %p265 = por %p263, %p264
      %p266 = scmp.ne.s32.totalorder %s255, %s256
      %p267 = scmp.eq.s32.totalorder %s32, 0
      %p268 = por %p266, %p267
      %p269 = scmp.ne.s32.totalorder %s255, %s256
      %p270 = scmp.eq.s32.totalorder %s33, 1
      %p271 = por %p269, %p270
      %p273 = scmp.ne.s32.totalorder %s256, %s272
      %p274 = scmp.eq.s32.totalorder %s33, 0
      %p275 = por %p273, %p274
      %p276 = scmp.le.s32.totalorder 1, %s27
      %p277 = scmp.lt.s32.totalorder %s27, 3
      %p278 = pnand %p276, %p277
      %p279 = pneg %p278
      // Predicated region
      $region9: #{tpu_custom_call.1} parent=5 // pred_check
        _
      $region10: #{tpu_custom_call.1} parent=5 // pred_check_branch
        %281 = sbr.rel (%p278) target = $region12
      $region11: #{tpu_custom_call.1} parent=5 // pred_region
        %s282 = ssub.s32 %s27, 1
        // Predicated region
        $region13: #{tpu_custom_call.1} parent=11 // pred_check
          %p283 = pneg %p74
        $region14: #{tpu_custom_call.1} parent=11 // pred_check_branch
          %285 = sbr.rel (%p283) target = $region16
        $region15: #{tpu_custom_call.1} parent=11 // pred_region
          %s287 = ssub.s32 320, 320
          %288 = vsyncadd [#allocation6], %s287
          %s289 = sshll.u32 [#allocation5], 4
          %s290 = int_to_ptr.vmem [resolvable:$true] %s289
          %295 = dma.hbm_to_vmem [thread:$0]  %s1, 320, %s290, [#allocation6], 64, 64, 4
        $region16: #{tpu_custom_call.1} parent=11 // pred_fallthru
          _
        // Predicated region
        $region17: #{tpu_custom_call.1} parent=11 // pred_check
          %p296 = pneg %p95
        $region18: #{tpu_custom_call.1} parent=11 // pred_check_branch
          %298 = sbr.rel (%p296) target = $region20
        $region19: #{tpu_custom_call.1} parent=11 // pred_region
          %s300 = ssub.s32 16, 16
          %301 = vsyncadd [#allocation6], %s300
          %s303 = sshll.u32 [#allocation7], 4
          %s304 = int_to_ptr.vmem [resolvable:$true] %s303
          %306 = dma.hbm_to_vmem [thread:$0]  %s2, 16, %s304, [#allocation6]
        $region20: #{tpu_custom_call.1} parent=11 // pred_fallthru
          _
        // Predicated region
        $region21: #{tpu_custom_call.1} parent=11 // pred_check
          %p307 = pneg %p116
        $region22: #{tpu_custom_call.1} parent=11 // pred_check_branch
          %309 = sbr.rel (%p307) target = $region24
        $region23: #{tpu_custom_call.1} parent=11 // pred_region
          %s311 = ssub.s32 16, 16
          %312 = vsyncadd [#allocation9], %s311
          %s314 = sshll.u32 [#allocation8], 4
          %s315 = int_to_ptr.vmem [resolvable:$true] %s314
          %317 = dma.hbm_to_vmem [thread:$0]  %s3, 16, %s315, [#allocation9]
        $region24: #{tpu_custom_call.1} parent=11 // pred_fallthru
          _
        // Predicated region
        $region25: #{tpu_custom_call.1} parent=11 // pred_check
          %p318 = pneg %p137
        $region26: #{tpu_custom_call.1} parent=11 // pred_check_branch
          %320 = sbr.rel (%p318) target = $region28
        $region27: #{tpu_custom_call.1} parent=11 // pred_region
          %s322 = ssub.s32 576, 576
          %323 = vsyncadd [#allocation9], %s322
          %s324 = sshll.u32 [#allocation10], 4
          %s325 = int_to_ptr.vmem [resolvable:$true] %s324
          %330 = dma.hbm_to_vmem [thread:$0]  %s4, 576, %s325, [#allocation9], 64, 64, 4
        $region28: #{tpu_custom_call.1} parent=11 // pred_fallthru
          _
        // Predicated region
        $region29: #{tpu_custom_call.1} parent=11 // pred_check
          %p331 = pneg %p158
        $region30: #{tpu_custom_call.1} parent=11 // pred_check_branch
          %333 = sbr.rel (%p331) target = $region32
        $region31: #{tpu_custom_call.1} parent=11 // pred_region
          %s335 = ssub.s32 16, 16
          %336 = vsyncadd [#allocation12], %s335
          %s338 = sshll.u32 [#allocation11], 4
          %s339 = int_to_ptr.vmem [resolvable:$true] %s338
          %341 = dma.hbm_to_vmem [thread:$0]  %s5, 16, %s339, [#allocation12]
        $region32: #{tpu_custom_call.1} parent=11 // pred_fallthru
          _
        // Predicated region
        $region33: #{tpu_custom_call.1} parent=11 // pred_check
          %p342 = pneg %p179
        $region34: #{tpu_custom_call.1} parent=11 // pred_check_branch
          %344 = sbr.rel (%p342) target = $region36
        $region35: #{tpu_custom_call.1} parent=11 // pred_region
          %s346 = ssub.s32 16, 16
          %347 = vsyncadd [#allocation12], %s346
          %s349 = sshll.u32 [#allocation13], 4
          %s350 = int_to_ptr.vmem [resolvable:$true] %s349
          %352 = dma.hbm_to_vmem [thread:$0]  %s6, 16, %s350, [#allocation12]
        $region36: #{tpu_custom_call.1} parent=11 // pred_fallthru
          _
        // Predicated region
        $region37: #{tpu_custom_call.1} parent=11 // pred_check
          %p353 = pneg %p200
        $region38: #{tpu_custom_call.1} parent=11 // pred_check_branch
          %355 = sbr.rel (%p353) target = $region40
        $region39: #{tpu_custom_call.1} parent=11 // pred_region
          %s357 = ssub.s32 32, 32
          %358 = vsyncadd [#allocation15], %s357
          %s360 = sshll.u32 [#allocation14], 4
          %s361 = int_to_ptr.vmem [resolvable:$true] %s360
          %363 = dma.hbm_to_vmem [thread:$0]  %s7, 32, %s361, [#allocation15]
        $region40: #{tpu_custom_call.1} parent=11 // pred_fallthru
          _
        // Predicated region
        $region41: #{tpu_custom_call.1} parent=11 // pred_check
          %p364 = pneg %p221
        $region42: #{tpu_custom_call.1} parent=11 // pred_check_branch
          %366 = sbr.rel (%p364) target = $region44
        $region43: #{tpu_custom_call.1} parent=11 // pred_region
          %s368 = ssub.s32 16, 16
          %369 = vsyncadd [#allocation15], %s368
          %s371 = sshll.u32 [#allocation16], 4
          %s372 = int_to_ptr.vmem [resolvable:$true] %s371
          %374 = dma.hbm_to_vmem [thread:$0]  %s8, 16, %s372, [#allocation15]
        $region44: #{tpu_custom_call.1} parent=11 // pred_fallthru
          _
        // Predicated region
        $region45: #{tpu_custom_call.1} parent=11 // pred_check
          %p375 = pneg %p242
        $region46: #{tpu_custom_call.1} parent=11 // pred_check_branch
          %377 = sbr.rel (%p375) target = $region48
        $region47: #{tpu_custom_call.1} parent=11 // pred_region
          %s379 = ssub.s32 16, 16
          %380 = vsyncadd [#allocation18], %s379
          %s382 = sshll.u32 [#allocation17], 4
          %s383 = int_to_ptr.vmem [resolvable:$true] %s382
          %385 = dma.hbm_to_vmem [thread:$0]  %s9, 16, %s383, [#allocation18]
        $region48: #{tpu_custom_call.1} parent=11 // pred_fallthru
          _
      $region12: #{tpu_custom_call.1} parent=5 // pred_fallthru
        _
      %p386 = scmp.lt.s32.totalorder %s27, 2
      // Predicated region
      $region49: #{tpu_custom_call.1} parent=5 // pred_check
        %p387 = pneg %p386
      $region50: #{tpu_custom_call.1} parent=5 // pred_check_branch
        %389 = sbr.rel (%p387) target = $region52
      $region51: #{tpu_custom_call.1} parent=5 // pred_region
        // Predicated region
        $region53: #{tpu_custom_call.1} parent=51 // pred_check
          %p390 = pneg %p47
        $region54: #{tpu_custom_call.1} parent=51 // pred_check_branch
          %392 = sbr.rel (%p390) target = $region56
        $region55: #{tpu_custom_call.1} parent=51 // pred_region
          %s393 = sand.u32 %s37, 1
          %s394 = scalar_lea.sflag [#allocation3], %s393
          %s395 = sand.u32 %s37, 1
          %s396 = smul.addr %s395, 8
          %s397 = scalar_lea.vmem [#allocation2], %s396
          %s399 = ssub.s32 128, 128
          %400 = vsyncadd %s394, %s399
          %s401 = smul.addr %s27, 2
          %s402 = smul.addr %s401, 64
          %s403 = scalar_lea.hbm %s0, %s402
          %s404 = sshll.u32 %s397, 4
          %s405 = int_to_ptr.vmem [resolvable:$true] %s404
          %410 = dma.hbm_to_vmem [thread:$0]  %s403, 128, %s405, %s394, 64, 64, 4
        $region56: #{tpu_custom_call.1} parent=51 // pred_fallthru
          _
      $region52: #{tpu_custom_call.1} parent=5 // pred_fallthru
        _
      %p411 = scmp.le.s32.totalorder 1, %s27
      %p412 = scmp.lt.s32.totalorder %s27, 3
      %p413 = pnand %p411, %p412
      %p414 = pneg %p413
      // Predicated region
      $region57: #{tpu_custom_call.1} parent=5 // pred_check
        _
      $region58: #{tpu_custom_call.1} parent=5 // pred_check_branch
        %416 = sbr.rel (%p413) target = $region60
      $region59: #{tpu_custom_call.1} parent=5 // pred_region
        %s417 = ssub.s32 %s27, 1
        %s418 = sand.u32 %s40, 1
        %s419 = scalar_lea.sflag [#allocation3], %s418
        %s420 = sand.u32 %s40, 1
        %s421 = smul.addr %s420, 8
        %s422 = scalar_lea.vmem [#allocation2], %s421
        // Predicated region
        $region61: #{tpu_custom_call.1} parent=59 // pred_check
          %p423 = pneg %p53
        $region62: #{tpu_custom_call.1} parent=59 // pred_check_branch
          %425 = sbr.rel (%p423) target = $region64
        $region63: #{tpu_custom_call.1} parent=59 // pred_region
          %426 = dma.done %s419, 128
        $region64: #{tpu_custom_call.1} parent=59 // pred_fallthru
          _
        // Predicated region
        $region65: #{tpu_custom_call.1} parent=59 // pred_check
          %p427 = pneg %p74
        $region66: #{tpu_custom_call.1} parent=59 // pred_check_branch
          %429 = sbr.rel (%p427) target = $region68
        $region67: #{tpu_custom_call.1} parent=59 // pred_region
          %430 = dma.done [#allocation6], 320
        $region68: #{tpu_custom_call.1} parent=59 // pred_fallthru
          _
        // Predicated region
        $region69: #{tpu_custom_call.1} parent=59 // pred_check
          %p431 = pneg %p95
        $region70: #{tpu_custom_call.1} parent=59 // pred_check_branch
          %433 = sbr.rel (%p431) target = $region72
        $region71: #{tpu_custom_call.1} parent=59 // pred_region
          %434 = dma.done [#allocation6], 16
        $region72: #{tpu_custom_call.1} parent=59 // pred_fallthru
          _
        // Predicated region
        $region73: #{tpu_custom_call.1} parent=59 // pred_check
          %p435 = pneg %p116
        $region74: #{tpu_custom_call.1} parent=59 // pred_check_branch
          %437 = sbr.rel (%p435) target = $region76
        $region75: #{tpu_custom_call.1} parent=59 // pred_region
          %438 = dma.done [#allocation9], 16
        $region76: #{tpu_custom_call.1} parent=59 // pred_fallthru
          _
        // Predicated region
        $region77: #{tpu_custom_call.1} parent=59 // pred_check
          %p439 = pneg %p137
        $region78: #{tpu_custom_call.1} parent=59 // pred_check_branch
          %441 = sbr.rel (%p439) target = $region80
        $region79: #{tpu_custom_call.1} parent=59 // pred_region
          %442 = dma.done [#allocation9], 576
        $region80: #{tpu_custom_call.1} parent=59 // pred_fallthru
          _
        // Predicated region
        $region81: #{tpu_custom_call.1} parent=59 // pred_check
          %p443 = pneg %p158
        $region82: #{tpu_custom_call.1} parent=59 // pred_check_branch
          %445 = sbr.rel (%p443) target = $region84
        $region83: #{tpu_custom_call.1} parent=59 // pred_region
          %446 = dma.done [#allocation12], 16
        $region84: #{tpu_custom_call.1} parent=59 // pred_fallthru
          _
        // Predicated region
        $region85: #{tpu_custom_call.1} parent=59 // pred_check
          %p447 = pneg %p179
        $region86: #{tpu_custom_call.1} parent=59 // pred_check_branch
          %449 = sbr.rel (%p447) target = $region88
        $region87: #{tpu_custom_call.1} parent=59 // pred_region
          %450 = dma.done [#allocation12], 16
        $region88: #{tpu_custom_call.1} parent=59 // pred_fallthru
          _
        // Predicated region
        $region89: #{tpu_custom_call.1} parent=59 // pred_check
          %p451 = pneg %p200
        $region90: #{tpu_custom_call.1} parent=59 // pred_check_branch
          %453 = sbr.rel (%p451) target = $region92
        $region91: #{tpu_custom_call.1} parent=59 // pred_region
          %454 = dma.done [#allocation15], 32
        $region92: #{tpu_custom_call.1} parent=59 // pred_fallthru
          _
        // Predicated region
        $region93: #{tpu_custom_call.1} parent=59 // pred_check
          %p455 = pneg %p221
        $region94: #{tpu_custom_call.1} parent=59 // pred_check_branch
          %457 = sbr.rel (%p455) target = $region96
        $region95: #{tpu_custom_call.1} parent=59 // pred_region
          %458 = dma.done [#allocation15], 16
        $region96: #{tpu_custom_call.1} parent=59 // pred_fallthru
          _
        // Predicated region
        $region97: #{tpu_custom_call.1} parent=59 // pred_check
          %p459 = pneg %p242
        $region98: #{tpu_custom_call.1} parent=59 // pred_check_branch
          %461 = sbr.rel (%p459) target = $region100
        $region99: #{tpu_custom_call.1} parent=59 // pred_region
          %462 = dma.done [#allocation18], 16
        $region100: #{tpu_custom_call.1} parent=59 // pred_fallthru
          _
        %s463 = sand.u32 %s40, 1
        %s464 = scalar_lea.sflag [#allocation3], %s463
        %s465 = sand.u32 %s40, 1
        %s466 = smul.addr %s465, 8
        %s467 = scalar_lea.vmem [#allocation2], %s466
        %p468 = pneg %p53
        %p469 = pneg %p50
        %p470 = pneg %p74
        %p471 = pneg %p71
        %p472 = pneg %p95
        %p473 = pneg %p92
        %p474 = pneg %p116
        %p475 = pneg %p113
        %p476 = pneg %p137
        %p477 = pneg %p134
        %p478 = pneg %p158
        %p479 = pneg %p155
        %p480 = pneg %p179
        %p481 = pneg %p176
        %p482 = pneg %p200
        %p483 = pneg %p197
        %p484 = pneg %p221
        %p485 = pneg %p218
        %p486 = pneg %p242
        %p487 = pneg %p239
        %p488 = pneg %p268
        %p489 = pneg %p265
        %s490 = sand.u32 %s255, 1
        %s491 = scalar_lea.sflag [#allocation4], %s490
        %s492 = sand.u32 %s255, 1
        %s493 = smul.addr %s492, 16
        %s494 = scalar_lea.vmem [#allocation19], %s493
        %v496 = vld [vmem:[%s422] sm:$0xf]
        %v497 = vld [vmem:[%s422 + $0x4] sm:$0xf]
        %v498 = vld [vmem:[#allocation14] sm:$0x3]
        %v501 = vunpack.c.l.b16 %v496
        %v502 = vunpack.c.l.b16 %v497
        %v503 = vpack.c.b16 %v502, %v501
        %vm504 = vcmask 31744
        %v506 = vsel %vm504, %v503, 0
        %vm508 = vcmask 1041408
        %v510 = vsel %vm508, %v498, 0
        %512 = vmatprep.subr.bf16.mxu0 0
        %513 = vmatpush1.bf16.msra.mxu0 %v510
        %514 = vmatprep.subr.bf16.mxu0 0
        %515 = vmatpush1.bf16.msra.mxu0 0
        %516 = vmatprep.subr.bf16.mxu0 0
        %517 = vmatpush1.bf16.msra.mxu0 0
        %518 = vmatprep.subr.bf16.mxu0 0
        %519 = vmatpush1.bf16.msra.mxu0 0
        %520 = vmatprep.subr.bf16.mxu0 0
        %521 = vmatpush1.bf16.msra.mxu0 0
        %522 = vmatprep.subr.bf16.mxu0 0
        %523 = vmatpush1.bf16.msra.mxu0 0
        %524 = vmatprep.subr.bf16.mxu0 0
        %525 = vmatpush1.bf16.msra.mxu0 0
        %526 = vmatprep.subr.bf16.mxu0 0
        %527 = vmatpush1.bf16.msra.mxu0 0
        %528 = vmatprep.subr.bf16.mxu0 0
        %529 = vmatpush1.bf16.msra.mxu0 0
        %530 = vmatprep.subr.bf16.mxu0 0
        %531 = vmatpush1.bf16.msra.mxu0 0
        %532 = vmatprep.subr.bf16.mxu0 0
        %533 = vmatpush1.bf16.msra.mxu0 0
        %534 = vmatprep.subr.bf16.mxu0 0
        %535 = vmatpush1.bf16.msra.mxu0 0
        %536 = vmatprep.subr.bf16.mxu0 0
        %537 = vmatpush1.bf16.msra.mxu0 0
        %538 = vmatprep.subr.bf16.mxu0 0
        %539 = vmatpush1.bf16.msra.mxu0 0
        %540 = vmatprep.subr.bf16.mxu0 0
        %541 = vmatpush1.bf16.msra.mxu0 0
        %542 = vmatprep.subr.bf16.mxu0 0
        %543 = vmatpush1.bf16.msra.mxu0 0
        %544 = vmatprep.mubr.bf16.mxu0 0
        %545 = vmatmul.mubr.bf16.gmra.mrb[0].mxu0 %v506
        %v546 = vpop.f32.mrb[0].mxu0
        %v547 = vadd.f32 0.0, %v546
        %v548 = vpop.f32.mrb[0].mxu0
        %v549 = vpop.f32.mrb[0].mxu0
        %v550 = vadd.f32 0.0, %v549
        %v551 = vpop.f32.mrb[0].mxu0
        %552 = vdwg.mxu0
        %v553 = vld [vmem:[#allocation16] sm:$0x1]
        %v555 = vlaneseq
        %v556 = vshrl.u32 %v555, 7
        %v557 = vsub.s32 0, %v556
        %v558 = vrot.slane %v553, %v557
        %v560 = vmul.f32 %v547, %v558
        %v561 = vmul.f32 %v550, %v558
        %v562 = vld [vmem:[#allocation17] sm:$0x1]
        %v564 = vlaneseq
        %v565 = vshrl.u32 %v564, 7
        %v566 = vsub.s32 0, %v565
        %v567 = vrot.slane %v562, %v566
        %v569 = vadd.f32 %v560, %v567
        %v570 = vadd.f32 %v561, %v567
        %v571 = vunpack.c.l.bf16 %v496
        %v572 = vunpack.c.l.bf16 %v497
        %vm575 = vcmask 1043456
        %v576 = vrot.slane %v571, 4
        %v577 = vrot.slane %v572, 4
        %v578 = vsel %vm575, %v576, %v577
        %v582 = vsel %vm575, 0.0, %v576
        %v583 = vsel %vm575, %v577, 0.0
        %vm586 = vcmask 1046528
        %v587 = vrot.slane %v582, 1
        %v588 = vrot.slane %v578, 1
        %v589 = vsel %vm586, %v587, %v588
        %v590 = vrot.slane %v583, 1
        %v591 = vsel %vm586, %v588, %v590
        %592 = vrot.lane.b32.xlu0 %v589, 4
        %v593 = vpop.permute.xlu0 %592
        %594 = vrot.lane.b32.xlu0 %v591, 4
        %v595 = vpop.permute.xlu0 %594
        %vm598 = vcmask 1045504
        %v599 = vrot.slane %v582, 2
        %v600 = vrot.slane %v578, 2
        %v601 = vsel %vm598, %v599, %v600
        %v602 = vrot.slane %v583, 2
        %v603 = vsel %vm598, %v600, %v602
        %604 = vrot.lane.b32.xlu0 %v601, 8
        %v605 = vpop.permute.xlu0 %604
        %606 = vrot.lane.b32.xlu0 %v603, 8
        %v607 = vpop.permute.xlu0 %606
        %vm610 = vcmask 1044480
        %v611 = vrot.slane %v582, 3
        %v612 = vrot.slane %v578, 3
        %v613 = vsel %vm610, %v611, %v612
        %v614 = vrot.slane %v583, 3
        %v615 = vsel %vm610, %v612, %v614
        %616 = vrot.lane.b32.xlu0 %v613, 12
        %v617 = vpop.permute.xlu0 %616
        %618 = vrot.lane.b32.xlu0 %v615, 12
        %v619 = vpop.permute.xlu0 %618
        %v622 = vrot.slane %v582, 4
        %v623 = vrot.slane %v578, 4
        %v624 = vsel %vm575, %v622, %v623
        %v625 = vrot.slane %v583, 4
        %v626 = vsel %vm575, %v623, %v625
        %627 = vrot.lane.b32.xlu0 %v624, 16
        %v628 = vpop.permute.xlu0 %627
        %629 = vrot.lane.b32.xlu0 %v626, 16
        %v630 = vpop.permute.xlu0 %629
        %vm633 = vcmask 1042432
        %v634 = vrot.slane %v582, 5
        %v635 = vrot.slane %v578, 5
        %v636 = vsel %vm633, %v634, %v635
        %v637 = vrot.slane %v583, 5
        %v638 = vsel %vm633, %v635, %v637
        %639 = vrot.lane.b32.xlu0 %v636, 20
        %v640 = vpop.permute.xlu0 %639
        %641 = vrot.lane.b32.xlu0 %v638, 20
        %v642 = vpop.permute.xlu0 %641
        %v645 = vrot.slane %v582, 6
        %v646 = vrot.slane %v578, 6
        %v647 = vsel %vm508, %v645, %v646
        %v648 = vrot.slane %v583, 6
        %v649 = vsel %vm508, %v646, %v648
        %650 = vrot.lane.b32.xlu0 %v647, 24
        %v651 = vpop.permute.xlu0 %650
        %652 = vrot.lane.b32.xlu0 %v649, 24
        %v653 = vpop.permute.xlu0 %652
        %vm656 = vcmask 1040384
        %v657 = vrot.slane %v582, 7
        %v658 = vrot.slane %v578, 7
        %v659 = vsel %vm656, %v657, %v658
        %v660 = vrot.slane %v583, 7
        %v661 = vsel %vm656, %v658, %v660
        %662 = vrot.lane.b32.xlu0 %v659, 28
        %v663 = vpop.permute.xlu0 %662
        %664 = vrot.lane.b32.xlu0 %v661, 28
        %v665 = vpop.permute.xlu0 %664
        %668 = vrot.lane.b32.xlu0 %v578, 32
        %v669 = vpop.permute.xlu0 %668
        %670 = vrot.lane.b32.xlu0 %v583, 32
        %v671 = vpop.permute.xlu0 %670
        %v674 = vsel %vm504, %v582, %v593
        %v675 = vsel %vm504, %v578, %v595
        %vm676 = vcmask 64512
        %v677 = vsel %vm676, %v674, %v605
        %v678 = vsel %vm676, %v675, %v607
        %vm679 = vcmask 97280
        %v680 = vsel %vm679, %v677, %v617
        %v681 = vsel %vm679, %v678, %v619
        %vm682 = vcmask 130048
        %v683 = vsel %vm682, %v680, %v628
        %v684 = vsel %vm682, %v681, %v630
        %vm685 = vcmask 162816
        %v686 = vsel %vm685, %v683, %v640
        %v687 = vsel %vm685, %v684, %v642
        %vm688 = vcmask 195584
        %v689 = vsel %vm688, %v686, %v651
        %v690 = vsel %vm688, %v687, %v653
        %vm691 = vcmask 228352
        %v692 = vsel %vm691, %v689, %v663
        %v693 = vsel %vm691, %v690, %v665
        %vm694 = vcmask 261120
        %v695 = vsel %vm694, %v692, %v669
        %v696 = vsel %vm694, %v693, %v671
        %v697 = vpack.c.bf16 %v696, %v695
        %v698 = vld [vmem:[#allocation5] sm:$0xf]
        %v699 = vld [vmem:[#allocation5 + $0x4] sm:$0xf]
        %v700 = vld [vmem:[#allocation5 + $0x8] sm:$0xf]
        %v701 = vld [vmem:[#allocation5 + $0xc] sm:$0xf]
        %v702 = vld [vmem:[#allocation5 + $0x10] sm:$0x3]
        %v708 = vunpack.c.l.b16 %v698
        %v709 = vunpack.c.l.b16 %v699
        %v710 = vunpack.c.l.b16 %v700
        %v711 = vunpack.c.l.b16 %v701
        %v712 = vunpack.c.l.b16 %v702
        %v713 = vpack.c.b16 %v709, %v708
        %v714 = vpack.c.b16 %v711, %v710
        %v715 = vpack.c.b16 %v712, %v712
        %vm718 = vcmask 293888
        %v720 = vsel %vm718, %v697, 0
        %v723 = vsel %vm508, %v715, 0
        %725 = vmatprep.subr.bf16.mxu0 0
        %726 = vmatpush1.bf16.msra.mxu0 %v713
        %727 = vmatprep.subr.bf16.mxu0 0
        %728 = vmatpush1.bf16.msra.mxu0 %v714
        %729 = vmatprep.subr.bf16.mxu0 0
        %730 = vmatpush1.bf16.msra.mxu0 %v723
        %731 = vmatprep.subr.bf16.mxu0 0
        %732 = vmatpush1.bf16.msra.mxu0 0
        %733 = vmatprep.subr.bf16.mxu0 0
        %734 = vmatpush1.bf16.msra.mxu0 0
        %735 = vmatprep.subr.bf16.mxu0 0
        %736 = vmatpush1.bf16.msra.mxu0 0
        %737 = vmatprep.subr.bf16.mxu0 0
        %738 = vmatpush1.bf16.msra.mxu0 0
        %739 = vmatprep.subr.bf16.mxu0 0
        %740 = vmatpush1.bf16.msra.mxu0 0
        %741 = vmatprep.subr.bf16.mxu0 0
        %742 = vmatpush1.bf16.msra.mxu0 0
        %743 = vmatprep.subr.bf16.mxu0 0
        %744 = vmatpush1.bf16.msra.mxu0 0
        %745 = vmatprep.subr.bf16.mxu0 0
        %746 = vmatpush1.bf16.msra.mxu0 0
        %747 = vmatprep.subr.bf16.mxu0 0
        %748 = vmatpush1.bf16.msra.mxu0 0
        %749 = vmatprep.subr.bf16.mxu0 0
        %750 = vmatpush1.bf16.msra.mxu0 0
        %751 = vmatprep.subr.bf16.mxu0 0
        %752 = vmatpush1.bf16.msra.mxu0 0
        %753 = vmatprep.subr.bf16.mxu0 0
        %754 = vmatpush1.bf16.msra.mxu0 0
        %755 = vmatprep.subr.bf16.mxu0 0
        %756 = vmatpush1.bf16.msra.mxu0 0
        %757 = vmatprep.mubr.bf16.mxu0 0
        %758 = vmatmul.mubr.bf16.gmra.mrb[0].mxu0 %v720
        %v759 = vpop.f32.mrb[0].mxu0
        %v760 = vadd.f32 0.0, %v759
        %v761 = vpop.f32.mrb[0].mxu0
        %v762 = vpop.f32.mrb[0].mxu0
        %v763 = vadd.f32 0.0, %v762
        %v764 = vpop.f32.mrb[0].mxu0
        %765 = vdwg.mxu0
        %v766 = vld [vmem:[#allocation7] sm:$0x1]
        %v768 = vlaneseq
        %v769 = vshrl.u32 %v768, 7
        %v770 = vsub.s32 0, %v769
        %v771 = vrot.slane %v766, %v770
        %v773 = vmul.f32 %v760, %v771
        %v774 = vmul.f32 %v763, %v771
        %v775 = vld [vmem:[#allocation8] sm:$0x1]
        %v777 = vlaneseq
        %v778 = vshrl.u32 %v777, 7
        %v779 = vsub.s32 0, %v778
        %v780 = vrot.slane %v775, %v779
        %v782 = vadd.f32 %v773, %v780
        %v783 = vadd.f32 %v774, %v780
        %v784 = vmax.f32 %v782, 0.0
        %v785 = vmax.f32 %v783, 0.0
        %v788 = vrot.slane %v784, 4
        %v789 = vrot.slane %v785, 4
        %v790 = vsel %vm575, %v788, %v789
        %v794 = vsel %vm575, 0.0, %v788
        %v795 = vsel %vm575, %v789, 0.0
        %v798 = vrot.slane %v794, 1
        %v799 = vrot.slane %v790, 1
        %v800 = vsel %vm586, %v798, %v799
        %v801 = vrot.slane %v795, 1
        %v802 = vsel %vm586, %v799, %v801
        %803 = vrot.lane.b32.xlu0 %v800, 8
        %v804 = vpop.permute.xlu0 %803
        %805 = vrot.lane.b32.xlu0 %v802, 8
        %v806 = vpop.permute.xlu0 %805
        %v809 = vrot.slane %v794, 2
        %v810 = vrot.slane %v790, 2
        %v811 = vsel %vm598, %v809, %v810
        %v812 = vrot.slane %v795, 2
        %v813 = vsel %vm598, %v810, %v812
        %814 = vrot.lane.b32.xlu0 %v811, 16
        %v815 = vpop.permute.xlu0 %814
        %816 = vrot.lane.b32.xlu0 %v813, 16
        %v817 = vpop.permute.xlu0 %816
        %v820 = vrot.slane %v794, 3
        %v821 = vrot.slane %v790, 3
        %v822 = vsel %vm610, %v820, %v821
        %v823 = vrot.slane %v795, 3
        %v824 = vsel %vm610, %v821, %v823
        %825 = vrot.lane.b32.xlu0 %v822, 24
        %v826 = vpop.permute.xlu0 %825
        %827 = vrot.lane.b32.xlu0 %v824, 24
        %v828 = vpop.permute.xlu0 %827
        %v831 = vrot.slane %v794, 4
        %v832 = vrot.slane %v790, 4
        %v833 = vsel %vm575, %v831, %v832
        %v834 = vrot.slane %v795, 4
        %v835 = vsel %vm575, %v832, %v834
        %836 = vrot.lane.b32.xlu0 %v833, 32
        %v837 = vpop.permute.xlu0 %836
        %838 = vrot.lane.b32.xlu0 %v835, 32
        %v839 = vpop.permute.xlu0 %838
        %v842 = vrot.slane %v794, 5
        %v843 = vrot.slane %v790, 5
        %v844 = vsel %vm633, %v842, %v843
        %v845 = vrot.slane %v795, 5
        %v846 = vsel %vm633, %v843, %v845
        %847 = vrot.lane.b32.xlu0 %v844, 40
        %v848 = vpop.permute.xlu0 %847
        %849 = vrot.lane.b32.xlu0 %v846, 40
        %v850 = vpop.permute.xlu0 %849
        %v853 = vrot.slane %v794, 6
        %v854 = vrot.slane %v790, 6
        %v855 = vsel %vm508, %v853, %v854
        %v856 = vrot.slane %v795, 6
        %v857 = vsel %vm508, %v854, %v856
        %858 = vrot.lane.b32.xlu0 %v855, 48
        %v859 = vpop.permute.xlu0 %858
        %860 = vrot.lane.b32.xlu0 %v857, 48
        %v861 = vpop.permute.xlu0 %860
        %v864 = vrot.slane %v794, 7
        %v865 = vrot.slane %v790, 7
        %v866 = vsel %vm656, %v864, %v865
        %v867 = vrot.slane %v795, 7
        %v868 = vsel %vm656, %v865, %v867
        %869 = vrot.lane.b32.xlu0 %v866, 56
        %v870 = vpop.permute.xlu0 %869
        %871 = vrot.lane.b32.xlu0 %v868, 56
        %v872 = vpop.permute.xlu0 %871
        %875 = vrot.lane.b32.xlu0 %v790, 64
        %v876 = vpop.permute.xlu0 %875
        %877 = vrot.lane.b32.xlu0 %v795, 64
        %v878 = vpop.permute.xlu0 %877
        %v881 = vsel %vm676, %v794, %v804
        %v882 = vsel %vm676, %v790, %v806
        %v883 = vsel %vm682, %v881, %v815
        %v884 = vsel %vm682, %v882, %v817
        %v885 = vsel %vm688, %v883, %v826
        %v886 = vsel %vm688, %v884, %v828
        %v887 = vsel %vm694, %v885, %v837
        %v888 = vsel %vm694, %v886, %v839
        %vm889 = vcmask 326656
        %v890 = vsel %vm889, %v887, %v848
        %v891 = vsel %vm889, %v888, %v850
        %vm892 = vcmask 392192
        %v893 = vsel %vm892, %v890, %v859
        %v894 = vsel %vm892, %v891, %v861
        %vm895 = vcmask 457728
        %v896 = vsel %vm895, %v893, %v870
        %v897 = vsel %vm895, %v894, %v872
        %vm898 = vcmask 523264
        %v899 = vsel %vm898, %v896, %v876
        %v900 = vsel %vm898, %v897, %v878
        %v901 = vpack.c.bf16 %v900, %v899
        %v902 = vld [vmem:[#allocation10] sm:$0xf]
        %v903 = vld [vmem:[#allocation10 + $0x4] sm:$0xf]
        %v904 = vld [vmem:[#allocation10 + $0x8] sm:$0xf]
        %v905 = vld [vmem:[#allocation10 + $0xc] sm:$0xf]
        %v906 = vld [vmem:[#allocation10 + $0x10] sm:$0xf]
        %v907 = vld [vmem:[#allocation10 + $0x14] sm:$0xf]
        %v908 = vld [vmem:[#allocation10 + $0x18] sm:$0xf]
        %v909 = vld [vmem:[#allocation10 + $0x1c] sm:$0xf]
        %v910 = vld [vmem:[#allocation10 + $0x20] sm:$0xf]
        %v920 = vunpack.c.l.b16 %v902
        %v921 = vunpack.c.l.b16 %v903
        %v922 = vunpack.c.l.b16 %v904
        %v923 = vunpack.c.l.b16 %v905
        %v924 = vunpack.c.l.b16 %v906
        %v925 = vunpack.c.l.b16 %v907
        %v926 = vunpack.c.l.b16 %v908
        %v927 = vunpack.c.l.b16 %v909
        %v928 = vunpack.c.l.b16 %v910
        %v929 = vpack.c.b16 %v921, %v920
        %v930 = vpack.c.b16 %v923, %v922
        %v931 = vpack.c.b16 %v925, %v924
        %v932 = vpack.c.b16 %v927, %v926
        %v933 = vpack.c.b16 %v928, %v928
        %vm938 = vcmask 588800
        %v940 = vsel %vm938, %v901, 0
        %v943 = vsel %vm575, %v933, 0
        %945 = vmatprep.subr.bf16.mxu0 0
        %946 = vmatpush1.bf16.msra.mxu0 %v929
        %947 = vmatprep.subr.bf16.mxu0 0
        %948 = vmatpush1.bf16.msra.mxu0 %v930
        %949 = vmatprep.subr.bf16.mxu0 0
        %950 = vmatpush1.bf16.msra.mxu0 %v931
        %951 = vmatprep.subr.bf16.mxu0 0
        %952 = vmatpush1.bf16.msra.mxu0 %v932
        %953 = vmatprep.subr.bf16.mxu0 0
        %954 = vmatpush1.bf16.msra.mxu0 %v943
        %955 = vmatprep.subr.bf16.mxu0 0
        %956 = vmatpush1.bf16.msra.mxu0 0
        %957 = vmatprep.subr.bf16.mxu0 0
        %958 = vmatpush1.bf16.msra.mxu0 0
        %959 = vmatprep.subr.bf16.mxu0 0
        %960 = vmatpush1.bf16.msra.mxu0 0
        %961 = vmatprep.subr.bf16.mxu0 0
        %962 = vmatpush1.bf16.msra.mxu0 0
        %963 = vmatprep.subr.bf16.mxu0 0
        %964 = vmatpush1.bf16.msra.mxu0 0
        %965 = vmatprep.subr.bf16.mxu0 0
        %966 = vmatpush1.bf16.msra.mxu0 0
        %967 = vmatprep.subr.bf16.mxu0 0
        %968 = vmatpush1.bf16.msra.mxu0 0
        %969 = vmatprep.subr.bf16.mxu0 0
        %970 = vmatpush1.bf16.msra.mxu0 0
        %971 = vmatprep.subr.bf16.mxu0 0
        %972 = vmatpush1.bf16.msra.mxu0 0
        %973 = vmatprep.subr.bf16.mxu0 0
        %974 = vmatpush1.bf16.msra.mxu0 0
        %975 = vmatprep.subr.bf16.mxu0 0
        %976 = vmatpush1.bf16.msra.mxu0 0
        %977 = vmatprep.mubr.bf16.mxu0 0
        %978 = vmatmul.mubr.bf16.gmra.mrb[0].mxu0 %v940
        %v979 = vpop.f32.mrb[0].mxu0
        %v980 = vadd.f32 0.0, %v979
        %v981 = vpop.f32.mrb[0].mxu0
        %v982 = vpop.f32.mrb[0].mxu0
        %v983 = vadd.f32 0.0, %v982
        %v984 = vpop.f32.mrb[0].mxu0
        %985 = vdwg.mxu0
        %v986 = vld [vmem:[#allocation11] sm:$0x1]
        %v988 = vlaneseq
        %v989 = vshrl.u32 %v988, 7
        %v990 = vsub.s32 0, %v989
        %v991 = vrot.slane %v986, %v990
        %v993 = vmul.f32 %v980, %v991
        %v994 = vmul.f32 %v983, %v991
        %v995 = vld [vmem:[#allocation13] sm:$0x1]
        %v997 = vlaneseq
        %v998 = vshrl.u32 %v997, 7
        %v999 = vsub.s32 0, %v998
        %v1000 = vrot.slane %v995, %v999
        %v1002 = vadd.f32 %v993, %v1000
        %v1003 = vadd.f32 %v994, %v1000
        %v1004 = vadd.f32 %v1002, %v569
        %v1005 = vadd.f32 %v1003, %v570
        %v1006 = vmax.f32 %v1004, 0.0
        %v1007 = vmax.f32 %v1005, 0.0
        %1008 = vst.msk [vmem:[%s494] sm:$0xff] %vm676, %v1006
        %1009 = vst.msk [vmem:[%s494 + $0x8] sm:$0xff] %vm676, %v1007
        %s1010 = sand.u32 %s255, 1
        %s1011 = scalar_lea.sflag [#allocation4], %s1010
        %s1012 = sand.u32 %s255, 1
        %s1013 = smul.addr %s1012, 16
        %s1014 = scalar_lea.vmem [#allocation19], %s1013
        // Predicated region
        $region101: #{tpu_custom_call.1} parent=59 // pred_check
          %p1015 = pneg %p265
        $region102: #{tpu_custom_call.1} parent=59 // pred_check_branch
          %1017 = sbr.rel (%p1015) target = $region104
        $region103: #{tpu_custom_call.1} parent=59 // pred_region
          %s1019 = ssub.s32 256, 256
          %1020 = vsyncadd %s1011, %s1019
          %s1021 = smul.addr %s32, 2
          %s1022 = smul.addr %s1021, 128
          %s1023 = scalar_lea.hbm %s10, %s1022
          %s1024 = sshll.u32 %s1014, 4
          %s1025 = int_to_ptr.vmem [resolvable:$true] %s1024
          %1030 = dma.vmem_to_hbm [thread:$0]  %s1025, 256, %s1023, %s1011, 128, 128, 8
        $region104: #{tpu_custom_call.1} parent=59 // pred_fallthru
          _
      $region60: #{tpu_custom_call.1} parent=5 // pred_fallthru
        _
      %p1031 = scmp.le.s32.totalorder 2, %s27
      // Predicated region
      $region105: #{tpu_custom_call.1} parent=5 // pred_check
        %p1032 = pneg %p1031
      $region106: #{tpu_custom_call.1} parent=5 // pred_check_branch
        %1034 = sbr.rel (%p1032) target = $region108
      $region107: #{tpu_custom_call.1} parent=5 // pred_region
        %s1035 = ssub.s32 %s27, 2
        // Predicated region
        $region109: #{tpu_custom_call.1} parent=107 // pred_check
          %p1036 = pneg %p271
        $region110: #{tpu_custom_call.1} parent=107 // pred_check_branch
          %1038 = sbr.rel (%p1036) target = $region112
        $region111: #{tpu_custom_call.1} parent=107 // pred_region
          %s1039 = sand.u32 %s256, 1
          %s1040 = scalar_lea.sflag [#allocation4], %s1039
          %s1041 = sand.u32 %s256, 1
          %s1042 = smul.addr %s1041, 16
          %s1043 = scalar_lea.vmem [#allocation19], %s1042
          %1044 = dma.done %s1040, 256
        $region112: #{tpu_custom_call.1} parent=107 // pred_fallthru
          _
      $region108: #{tpu_custom_call.1} parent=5 // pred_fallthru
        _
    $region6: #{tpu_custom_call.1} parent=1 // loop_footer
      %s31 = sadd.s32 1, %s27
    $region7: #{tpu_custom_call.1} parent=1 // loop_footer_branch
      %26 = sbr.rel target = $region3
    $region8: #{tpu_custom_call.1} parent=1 // loop_exit
      _
    %1045 = vsyncpa [#allocation3], 1
    %s1046 = scalar_lea.sflag [#allocation3], 1
    %1047 = vsyncpa %s1046, 1
    %1048 = vsyncpa [#allocation6], 1
    %1049 = vsyncpa [#allocation9], 1
    %1050 = vsyncpa [#allocation12], 1
    %1051 = vsyncpa [#allocation15], 1
    %1052 = vsyncpa [#allocation18], 1
    %1053 = vsyncpa [#allocation4], 1
    %s1054 = scalar_lea.sflag [#allocation4], 1
    %1055 = vsyncpa %s1054, 1

</llo_original>
